<compile_context>
chip_gen: v6e
topology: v6e:2x2x1
jax: 0.10.0
libtpu: 0.0.40
codegen_flags: <defaults>
</compile_context>

<pallas_src>
import jax
import jax.numpy as jnp
from jax.experimental import pallas as pl
from jax.experimental.pallas import tpu as pltpu


def _gcn_kernel(w_ref, x_ref, cw_ref, cb_ref, o_ref):
    # w_ref: (B, 1, N), x_ref: (B, C, N),
    # cw_ref: (C, C) BN-folded conv weight, cb_ref: (C, 1) BN-folded conv bias,
    # o_ref: (B, C, N).
    B, C, N = x_ref.shape

    # ---- attention: A = s_b * ones(N,N) + I, s_b = sum(relu(tanh(w_b))^2) ----
    t = jnp.maximum(jnp.tanh(w_ref[...]), 0.0)            # (B, 1, N)  EUP tanh
    s = jnp.sum(t * t, axis=-1, keepdims=True)            # (B, 1, 1)  lane reduce

    # ---- graph aggregation via the rank-1 closed form ----
    # rowsum(A) = N*s + 1  =>  L = A / (N*s + 1)
    # agg = x @ L^T = (x + s * rowsum_N(x)) / (N*s + 1)
    inv = 1.0 / (N * s + 1.0)                              # (B, 1, 1) exact scalar recip
    x = x_ref[...]                                         # (B, C, N)
    xs = jnp.sum(x, axis=-1, keepdims=True)                # (B, C, 1)  lane reduce
    agg = (x + s * xs) * inv                               # (B, C, N)  AXPY on VPU

    # ---- 1x1 conv (+ folded BatchNorm) as one batched channel matmul, ReLU ----
    cwb = jnp.broadcast_to(cw_ref[...], (B, C, C))         # (B, C_out, C_in)
    y = jnp.einsum("boc,bcn->bon", cwb, agg,
                   preferred_element_type=jnp.float32)     # (B, C, N) on MXU
    y = y + cb_ref[...]                                    # (C,1) broadcasts over B, lanes
    o_ref[...] = jnp.maximum(y, 0.0)                       # ReLU


def gcn_block_forward(x, w, conv_w, conv_b, bn_gamma, bn_beta, bn_mean, bn_var,
                      eps=1e-5):
    """x: (B, C, N, 1) float32, w: (B, N) float32 -> (B, C, N, 1) float32."""
    B, C, N, _ = x.shape
    x3 = x[..., 0]                                         # (B, C, N)
    w3 = w[:, None, :]                                     # (B, 1, N)

    # Fold eval-mode BatchNorm into the 1x1-conv weight/bias (host-side, free).
    scale = bn_gamma / jnp.sqrt(bn_var + eps)              # (C,)
    cw = scale[:, None] * conv_w.reshape(C, C)             # (C_out, C_in)
    cb = (scale * conv_b + bn_beta - bn_mean * scale).reshape(C, 1)

    out3 = pl.pallas_call(
        _gcn_kernel,
        out_shape=jax.ShapeDtypeStruct((B, C, N), jnp.float32),
        grid=(1,),  # whole problem in one grid step; avoids per-step overhead
        in_specs=[
            pl.BlockSpec((B, 1, N), lambda i: (0, 0, 0)),   # w
            pl.BlockSpec((B, C, N), lambda i: (0, 0, 0)),   # x
            pl.BlockSpec((C, C), lambda i: (0, 0)),         # folded conv weight
            pl.BlockSpec((C, 1), lambda i: (0, 0)),         # folded conv bias
        ],
        out_specs=pl.BlockSpec((B, C, N), lambda i: (0, 0, 0)),
        compiler_params=pltpu.CompilerParams(
            dimension_semantics=("arbitrary",)),
    )(w3, x3, cw, cb)

    return out3[..., None]                                 # (B, C, N, 1)


def _reference(x, w, conv_w, conv_b, bn_gamma, bn_beta, bn_mean, bn_var, eps=1e-5):
    """Pure-JAX reference mirroring the PyTorch forward exactly."""
    B, C, N, _ = x.shape
    t = jnp.maximum(jnp.tanh(w), 0.0)[..., None]              # (B, N, 1)
    A = jnp.einsum("bni,bnj->bij", t, t)                      # (B, 1, 1)
    A = A + jnp.eye(N)[None]                                  # (B, N, N)
    D = (1.0 / jnp.sum(A, axis=-1)) ** 0.5                    # (B, N)
    L = D[:, :, None] * A * D[:, None, :]                     # D @ A @ D
    xt = jnp.transpose(x[..., 0], (0, 2, 1))                  # (B, N, C)
    agg = jnp.transpose(jnp.einsum("bij,bjc->bic", L, xt), (0, 2, 1))  # (B, C, N)
    y = jnp.einsum("oc,bcn->bon", conv_w.reshape(C, C), agg) + conv_b[None, :, None]
    scale = bn_gamma / jnp.sqrt(bn_var + eps)
    shift = bn_beta - bn_mean * scale
    y = y * scale[None, :, None] + shift[None, :, None]
    return jnp.maximum(y, 0.0)[..., None]


if __name__ == "__main__":
    B, C, N = 2, 8, 16
    key = jax.random.PRNGKey(0)
    kx, kw, kcw, kcb, kg, kb, km, kv = jax.random.split(key, 8)

    x = jax.random.normal(kx, (B, C, N, 1), dtype=jnp.float32)
    w = jax.random.normal(kw, (B, N), dtype=jnp.float32)

    # Deterministic parameter init (shapes from nn.Conv2d(C, C, (1,1)) + BN(C)).
    conv_w = jax.random.normal(kcw, (C, C, 1, 1), dtype=jnp.float32) * 0.1
    conv_b = jax.random.normal(kcb, (C,), dtype=jnp.float32) * 0.1
    bn_gamma = 1.0 + 0.1 * jax.random.normal(kg, (C,), dtype=jnp.float32)
    bn_beta = 0.1 * jax.random.normal(kb, (C,), dtype=jnp.float32)
    bn_mean = 0.1 * jax.random.normal(km, (C,), dtype=jnp.float32)
    bn_var = jnp.abs(jax.random.normal(kv, (C,), dtype=jnp.float32)) + 0.5

    out = gcn_block_forward(x, w, conv_w, conv_b, bn_gamma, bn_beta, bn_mean, bn_var)
    out = jax.block_until_ready(out)

    ref = _reference(x, w, conv_w, conv_b, bn_gamma, bn_beta, bn_mean, bn_var)
    assert out.shape == (B, C, N, 1)
    assert jnp.allclose(out, ref, rtol=1e-4, atol=1e-5), "mismatch vs reference"

    print("KERNEL_OK")
</pallas_src>

<mosaic_0001>
module attributes {stable_mosaic.version = 11 : i64} {
  func.func @_gcn_kernel(%arg0: i32, %arg1: memref<2x1x16xf32, #tpu.memory_space<vmem>>, %arg2: memref<2x8x16xf32, #tpu.memory_space<vmem>>, %arg3: memref<8x8xf32, #tpu.memory_space<vmem>>, %arg4: memref<8x1xf32, #tpu.memory_space<vmem>>, %arg5: memref<2x8x16xf32, #tpu.memory_space<vmem>>) attributes {dimension_semantics = [#tpu.dimension_semantics<arbitrary>], iteration_bounds = array<i64: 1>, scalar_prefetch = 0 : i64, scratch_operands = 0 : i64, tpu.core_type = #tpu.core_type<tc>, window_params = [{pipeline_mode = #tpu.pipeline_mode<synchronous>, transform_indices = @transform_0, window_bounds = array<i64: 2, 1, 16>}, {pipeline_mode = #tpu.pipeline_mode<synchronous>, transform_indices = @transform_1, window_bounds = array<i64: 2, 8, 16>}, {pipeline_mode = #tpu.pipeline_mode<synchronous>, transform_indices = @transform_2, window_bounds = array<i64: 8, 8>}, {pipeline_mode = #tpu.pipeline_mode<synchronous>, transform_indices = @transform_3, window_bounds = array<i64: 8, 1>}, {pipeline_mode = #tpu.pipeline_mode<synchronous>, transform_indices = @transform_4, window_bounds = array<i64: 2, 8, 16>}]} {
    %c0 = arith.constant 0 : index
    %c0_0 = arith.constant 0 : index
    %c0_1 = arith.constant 0 : index
    %0 = vector.load %arg1[%c0, %c0_0, %c0_1] : memref<2x1x16xf32, #tpu.memory_space<vmem>>, vector<2x1x16xf32>
    %1 = math.tanh %0 : vector<2x1x16xf32>
    %cst = arith.constant 0.000000e+00 : f32
    %2 = vector.broadcast %cst : f32 to vector<2x1x16xf32>
    %3 = arith.maximumf %1, %2 : vector<2x1x16xf32>
    %4 = arith.mulf %3, %3 : vector<2x1x16xf32>
    %cst_2 = arith.constant dense<0.000000e+00> : vector<2x1xf32>
    %5 = vector.multi_reduction <add>, %4, %cst_2 [2] : vector<2x1x16xf32> to vector<2x1xf32>
    %6 = vector.shape_cast %5 : vector<2x1xf32> to vector<2x1x1xf32>
    %cst_3 = arith.constant 1.600000e+01 : f32
    %7 = vector.broadcast %cst_3 : f32 to vector<2x1x1xf32>
    %8 = arith.mulf %7, %6 : vector<2x1x1xf32>
    %cst_4 = arith.constant 1.000000e+00 : f32
    %9 = vector.broadcast %cst_4 : f32 to vector<2x1x1xf32>
    %10 = arith.addf %8, %9 : vector<2x1x1xf32>
    %cst_5 = arith.constant 1.000000e+00 : f32
    %11 = vector.broadcast %cst_5 : f32 to vector<2x1x1xf32>
    %12 = arith.divf %11, %10 : vector<2x1x1xf32>
    %c0_6 = arith.constant 0 : index
    %c0_7 = arith.constant 0 : index
    %c0_8 = arith.constant 0 : index
    %13 = vector.load %arg2[%c0_6, %c0_7, %c0_8] : memref<2x8x16xf32, #tpu.memory_space<vmem>>, vector<2x8x16xf32>
    %cst_9 = arith.constant dense<0.000000e+00> : vector<2x8xf32>
    %14 = vector.multi_reduction <add>, %13, %cst_9 [2] : vector<2x8x16xf32> to vector<2x8xf32>
    %15 = vector.shape_cast %14 : vector<2x8xf32> to vector<2x8x1xf32>
    %16 = vector.broadcast %6 : vector<2x1x1xf32> to vector<2x8x1xf32>
    %17 = arith.mulf %16, %15 : vector<2x8x1xf32>
    %18 = vector.broadcast %17 : vector<2x8x1xf32> to vector<2x8x16xf32>
    %19 = arith.addf %13, %18 : vector<2x8x16xf32>
    %20 = vector.broadcast %12 : vector<2x1x1xf32> to vector<2x8x16xf32>
    %21 = arith.mulf %19, %20 : vector<2x8x16xf32>
    %c0_10 = arith.constant 0 : index
    %c0_11 = arith.constant 0 : index
    %22 = vector.load %arg3[%c0_10, %c0_11] : memref<8x8xf32, #tpu.memory_space<vmem>>, vector<8x8xf32>
    %23 = vector.shape_cast %22 : vector<8x8xf32> to vector<1x8x8xf32>
    %24 = vector.broadcast %23 : vector<1x8x8xf32> to vector<2x8x8xf32>
    "tpu.trace_start"() <{level = 10 : i32, message = "boc,bcn->bon"}> : () -> ()
    %cst_12 = arith.constant dense<0.000000e+00> : vector<2x8x16xf32>
    %25 = tpu.matmul %24, %21, %cst_12 {dimension_numbers = #tpu.dot_dimension_numbers<[2], [1], [1], [2], [0, 0, 0, 1, 1, 2], [0], [0]>} : vector<2x8x8xf32>, vector<2x8x16xf32>, vector<2x8x16xf32> -> vector<2x8x16xf32>
    "tpu.trace_stop"() : () -> ()
    %c0_13 = arith.constant 0 : index
    %c0_14 = arith.constant 0 : index
    %26 = vector.load %arg4[%c0_13, %c0_14] : memref<8x1xf32, #tpu.memory_space<vmem>>, vector<8x1xf32>
    %27 = vector.shape_cast %26 : vector<8x1xf32> to vector<1x8x1xf32>
    %28 = vector.broadcast %27 : vector<1x8x1xf32> to vector<2x8x16xf32>
    %29 = arith.addf %25, %28 : vector<2x8x16xf32>
    %cst_15 = arith.constant 0.000000e+00 : f32
    %30 = vector.broadcast %cst_15 : f32 to vector<2x8x16xf32>
    %31 = arith.maximumf %29, %30 : vector<2x8x16xf32>
    %c0_16 = arith.constant 0 : index
    %c0_17 = arith.constant 0 : index
    %c0_18 = arith.constant 0 : index
    %32 = vector.load %arg5[%c0_16, %c0_17, %c0_18] : memref<2x8x16xf32, #tpu.memory_space<vmem>>, vector<2x8x16xf32>
    tpu.vector_store %arg5[%c0_16, %c0_17, %c0_18], %31 {strides = array<i32>} : memref<2x8x16xf32, #tpu.memory_space<vmem>>, vector<2x8x16xf32>,
    return
  }
  func.func @transform_0(%arg0: i32) -> (i32, i32, i32) {
    %c0_i32 = arith.constant 0 : i32
    %c0_i32_0 = arith.constant 0 : i32
    %c0_i32_1 = arith.constant 0 : i32
    %c0_i32_2 = arith.constant 0 : i32
    return %c0_i32, %c0_i32_0, %c0_i32_1 : i32, i32, i32
  }
  func.func @transform_1(%arg0: i32) -> (i32, i32, i32) {
    %c0_i32 = arith.constant 0 : i32
    %c0_i32_0 = arith.constant 0 : i32
    %c0_i32_1 = arith.constant 0 : i32
    %c0_i32_2 = arith.constant 0 : i32
    return %c0_i32, %c0_i32_0, %c0_i32_1 : i32, i32, i32
  }
  func.func @transform_2(%arg0: i32) -> (i32, i32) {
    %c0_i32 = arith.constant 0 : i32
    %c0_i32_0 = arith.constant 0 : i32
    %c0_i32_1 = arith.constant 0 : i32
    return %c0_i32, %c0_i32_0 : i32, i32
  }
  func.func @transform_3(%arg0: i32) -> (i32, i32) {
    %c0_i32 = arith.constant 0 : i32
    %c0_i32_0 = arith.constant 0 : i32
    %c0_i32_1 = arith.constant 0 : i32
    return %c0_i32, %c0_i32_0 : i32, i32
  }
  func.func @transform_4(%arg0: i32) -> (i32, i32, i32) {
    %c0_i32 = arith.constant 0 : i32
    %c0_i32_0 = arith.constant 0 : i32
    %c0_i32_1 = arith.constant 0 : i32
    %c0_i32_2 = arith.constant 0 : i32
    return %c0_i32, %c0_i32_0, %c0_i32_1 : i32, i32, i32
  }
}

</mosaic_0001>

<llo_original>
// kernel: tpu_custom_call.1
$region0: #{tpu_custom_call.1}
  #allocation0 [shape = 'u32[]', space=smem, size = 0x4, offset = 0x4, fixed_abs, tag = 'smem constant byte address 0x4 - core index']
  #allocation1 [shape = 'u32[144,128]{1,0:T(1,128)}', space=vmem, size = 0x12000, scoped, tag = 'internal scratch']
  %s0 = inlined_call_operand.vmem [shape: f32[2,1,16], index: 0, kind: input, shape index: {}]
  %s1 = inlined_call_operand.hbm [shape: f32[2,8,16], index: 1, kind: input, shape index: {}]
  %s2 = inlined_call_operand.vmem [shape: f32[8,8], index: 2, kind: input, shape index: {}]
  %s3 = inlined_call_operand.vmem [shape: f32[8,1], index: 3, kind: input, shape index: {}]
  %s4 = inlined_call_operand.hbm [shape: f32[2,8,16], index: 4, kind: output, shape index: {}]
  %s5 = sld [smem:[#allocation0]]
  $region30: #{tpu_custom_call.1} parent=0
    _
  %s7 = ssub.s32 1, %s5
  %s8 = scalar_select 0, %s7, %s5
  $region1: #{tpu_custom_call.1} parent=0
    #allocation2 [shape = 'u8[8192]{0}', space=vmem, size = 0x2000, scoped, tag = 'input window, operand 1, single buffered']
    #allocation3 [shape = 's32[1]{0}', space=sflag, size = 0x4, scoped, tag = 'scoped memory for tpu_custom_call.1']
    #allocation4 [shape = 's32[1]{0}', space=sflag, size = 0x4, scoped, tag = 'scoped memory for tpu_custom_call.1']
    #allocation5 [shape = 'u8[8192]{0}', space=vmem, size = 0x2000, scoped, tag = 'output window, operand 0, single buffered']
    %9 = vsyncpa [#allocation3], 0
    %10 = vsyncpa [#allocation4], 0
    // Predicated region
    $region2: #{tpu_custom_call.1} parent=1 // pred_check
      _
    $region3: #{tpu_custom_call.1} parent=1 // pred_check_branch
      %12 = sbr.rel (0) target = $region5
    $region4: #{tpu_custom_call.1} parent=1 // pred_region
      _
    $region5: #{tpu_custom_call.1} parent=1 // pred_fallthru
      _
    // Predicated region
    $region6: #{tpu_custom_call.1} parent=1 // pred_check
      _
    $region7: #{tpu_custom_call.1} parent=1 // pred_check_branch
      %14 = sbr.rel (0) target = $region9
    $region8: #{tpu_custom_call.1} parent=1 // pred_region
      %s16 = ssub.s32 256, 256
      %17 = vsyncadd [#allocation3], %s16
      %s18 = sshll.u32 [#allocation2], 4
      %s19 = int_to_ptr.vmem [resolvable:$true] %s18
      %24 = dma.hbm_to_vmem [thread:$0]  %s1, 256, %s19, [#allocation3], 128, 128, 8
    $region9: #{tpu_custom_call.1} parent=1 // pred_fallthru
      _
    // Predicated region
    $region10: #{tpu_custom_call.1} parent=1 // pred_check
      _
    $region11: #{tpu_custom_call.1} parent=1 // pred_check_branch
      %26 = sbr.rel (0) target = $region13
    $region12: #{tpu_custom_call.1} parent=1 // pred_region
      _
    $region13: #{tpu_custom_call.1} parent=1 // pred_fallthru
      _
    // Predicated region
    $region14: #{tpu_custom_call.1} parent=1 // pred_check
      _
    $region15: #{tpu_custom_call.1} parent=1 // pred_check_branch
      %28 = sbr.rel (0) target = $region17
    $region16: #{tpu_custom_call.1} parent=1 // pred_region
      _
    $region17: #{tpu_custom_call.1} parent=1 // pred_fallthru
      _
    // Predicated region
    $region18: #{tpu_custom_call.1} parent=1 // pred_check
      _
    $region19: #{tpu_custom_call.1} parent=1 // pred_check_branch
      %30 = sbr.rel (0) target = $region21
    $region20: #{tpu_custom_call.1} parent=1 // pred_region
      %31 = dma.done [#allocation3], 256
    $region21: #{tpu_custom_call.1} parent=1 // pred_fallthru
      _
    %v32 = vld [vmem:[%s0] sm:$0x1]
    %v33 = vld [vmem:[%s0 + $0x1] sm:$0x1]
    %v34 = vtanh.pop %v32
    %v35 = vtanh.pop %v33
    %v36 = vmax.f32 %v34, 0.0
    %v37 = vmax.f32 %v35, 0.0
    %v38 = vmul.f32 %v36, %v36
    %v39 = vmul.f32 %v37, %v37
    %vm40 = vcmask 122880
    %v41 = vsel %vm40, %v38, 0.0
    %42 = vadd.xlane.f32.xlu0 %v41
    %v43 = vpop.xlane.xlu0 %42
    %v44 = vsel %vm40, %v39, 0.0
    %45 = vadd.xlane.f32.xlu0 %v44
    %v46 = vpop.xlane.xlu0 %45
    %v47 = vmul.f32 %v43, 16.0
    %v48 = vmul.f32 %v46, 16.0
    %v49 = vadd.f32 %v47, 1.0
    %v50 = vadd.f32 %v48, 1.0
    %v51 = vrcp.pop %v49
    %v52 = vmul.f32 1.0, %v51
    %v53 = vrcp.pop %v50
    %v54 = vmul.f32 1.0, %v53
    %v55 = vld [vmem:[#allocation2] sm:$0xff]
    %v56 = vld [vmem:[#allocation2 + $0x8] sm:$0xff]
    %vm57 = vcmask 130048
    %v58 = vsel %vm57, %v55, 0.0
    %59 = vadd.xlane.f32.xlu0 %v58
    %v60 = vpop.xlane.xlu0 %59
    %v61 = vsel %vm57, %v56, 0.0
    %62 = vadd.xlane.f32.xlu0 %v61
    %v63 = vpop.xlane.xlu0 %62
    %v64 = vlaneseq
    %v65 = vshrl.u32 %v64, 7
    %v66 = vsub.s32 0, %v65
    %v67 = vrot.slane %v43, %v66
    %v68 = vlaneseq
    %v69 = vshrl.u32 %v68, 7
    %v70 = vsub.s32 0, %v69
    %v71 = vrot.slane %v46, %v70
    %v72 = vmul.f32 %v67, %v60
    %v73 = vmul.f32 %v71, %v63
    %v74 = vadd.f32 %v55, %v72
    %v75 = vadd.f32 %v56, %v73
    %v76 = vlaneseq
    %v77 = vshrl.u32 %v76, 7
    %v78 = vsub.s32 0, %v77
    %v79 = vrot.slane %v52, %v78
    %v80 = vlaneseq
    %v81 = vshrl.u32 %v80, 7
    %v82 = vsub.s32 0, %v81
    %v83 = vrot.slane %v54, %v82
    %v84 = vmul.f32 %v74, %v79
    %v85 = vmul.f32 %v75, %v83
    %v86 = vld [vmem:[%s2] sm:$0xff]
    %v87 = vld [vmem:[%s3] sm:$0xff]
    %89 = vset.pattern.permute.xlu0 0
    %90 = vperm.xlu0 %89, %v87
    %v91 = vpop.permute.xlu0 %90
    %vm93 = vcmask 64512
    %v95 = vsel %vm93, %v86, 0
    %97 = vmatprep.subr.mxu0 0.0
    %98 = vmatpush1.msra.mxu0 0.0
    %99 = vmatprep.subr.mxu0 0.0
    %100 = vmatpush1.msra.mxu0 0.0
    %101 = vmatprep.subr.mxu0 0.0
    %102 = vmatpush1.msra.mxu0 0.0
    %103 = vmatprep.subr.mxu0 0.0
    %104 = vmatpush1.msra.mxu0 0.0
    %105 = vmatprep.subr.mxu0 0.0
    %106 = vmatpush1.msra.mxu0 0.0
    %107 = vmatprep.subr.mxu0 0.0
    %108 = vmatpush1.msra.mxu0 0.0
    %109 = vmatprep.subr.mxu0 0.0
    %110 = vmatpush1.msra.mxu0 0.0
    %111 = vmatprep.subr.mxu0 0.0
    %112 = vmatpush1.msra.mxu0 0.0
    %113 = vmatprep.subr.mxu0 0.0
    %114 = vmatpush1.msra.mxu0 0.0
    %115 = vmatprep.subr.mxu0 0.0
    %116 = vmatpush1.msra.mxu0 0.0
    %117 = vmatprep.subr.mxu0 0.0
    %118 = vmatpush1.msra.mxu0 0.0
    %119 = vmatprep.subr.mxu0 0.0
    %120 = vmatpush1.msra.mxu0 0.0
    %121 = vmatprep.subr.mxu0 0.0
    %122 = vmatpush1.msra.mxu0 0.0
    %123 = vmatprep.subr.mxu0 0.0
    %124 = vmatpush1.msra.mxu0 0.0
    %125 = vmatprep.subr.mxu0 0.0
    %126 = vmatpush1.msra.mxu0 0.0
    %127 = vmatprep.subr.mxu0 0.0
    %128 = vmatpush1.msra.mxu0 %v84
    %129 = vmatprep.subr.mxu0 0.0
    %130 = vmatpush2.msra.mxu0 0.0
    %131 = vmatprep.subr.mxu0 0.0
    %132 = vmatpush2.msra.mxu0 0.0
    %133 = vmatprep.subr.mxu0 0.0
    %134 = vmatpush2.msra.mxu0 0.0
    %135 = vmatprep.subr.mxu0 0.0
    %136 = vmatpush2.msra.mxu0 0.0
    %137 = vmatprep.subr.mxu0 0.0
    %138 = vmatpush2.msra.mxu0 0.0
    %139 = vmatprep.subr.mxu0 0.0
    %140 = vmatpush2.msra.mxu0 0.0
    %141 = vmatprep.subr.mxu0 0.0
    %142 = vmatpush2.msra.mxu0 0.0
    %143 = vmatprep.subr.mxu0 0.0
    %144 = vmatpush2.msra.mxu0 0.0
    %145 = vmatprep.subr.mxu0 0.0
    %146 = vmatpush2.msra.mxu0 0.0
    %147 = vmatprep.subr.mxu0 0.0
    %148 = vmatpush2.msra.mxu0 0.0
    %149 = vmatprep.subr.mxu0 0.0
    %150 = vmatpush2.msra.mxu0 0.0
    %151 = vmatprep.subr.mxu0 0.0
    %152 = vmatpush2.msra.mxu0 0.0
    %153 = vmatprep.subr.mxu0 0.0
    %154 = vmatpush2.msra.mxu0 0.0
    %155 = vmatprep.subr.mxu0 0.0
    %156 = vmatpush2.msra.mxu0 0.0
    %157 = vmatprep.subr.mxu0 0.0
    %158 = vmatpush2.msra.mxu0 0.0
    %159 = vmatprep.subr.mxu0 0.0
    %160 = vmatpush2.msra.mxu0 0.0
    %161 = vmatprep.mubr.f32.mxu0 0.0
    %162 = vmatmul.mubr.f32.gmra.mxu0 %v95
    %v163 = vpop.f32.mrf.mxu0
    %v164 = vadd.f32 %v91, %v163
    %v165 = vpop.f32.mrf.mxu0
    %166 = vdwg.mxu0
    %167 = vmatprep.subr.mxu0 0.0
    %168 = vmatpush1.msra.mxu0 0.0
    %169 = vmatprep.subr.mxu0 0.0
    %170 = vmatpush1.msra.mxu0 0.0
    %171 = vmatprep.subr.mxu0 0.0
    %172 = vmatpush1.msra.mxu0 0.0
    %173 = vmatprep.subr.mxu0 0.0
    %174 = vmatpush1.msra.mxu0 0.0
    %175 = vmatprep.subr.mxu0 0.0
    %176 = vmatpush1.msra.mxu0 0.0
    %177 = vmatprep.subr.mxu0 0.0
    %178 = vmatpush1.msra.mxu0 0.0
    %179 = vmatprep.subr.mxu0 0.0
    %180 = vmatpush1.msra.mxu0 0.0
    %181 = vmatprep.subr.mxu0 0.0
    %182 = vmatpush1.msra.mxu0 0.0
    %183 = vmatprep.subr.mxu0 0.0
    %184 = vmatpush1.msra.mxu0 0.0
    %185 = vmatprep.subr.mxu0 0.0
    %186 = vmatpush1.msra.mxu0 0.0
    %187 = vmatprep.subr.mxu0 0.0
    %188 = vmatpush1.msra.mxu0 0.0
    %189 = vmatprep.subr.mxu0 0.0
    %190 = vmatpush1.msra.mxu0 0.0
    %191 = vmatprep.subr.mxu0 0.0
    %192 = vmatpush1.msra.mxu0 0.0
    %193 = vmatprep.subr.mxu0 0.0
    %194 = vmatpush1.msra.mxu0 0.0
    %195 = vmatprep.subr.mxu0 0.0
    %196 = vmatpush1.msra.mxu0 0.0
    %197 = vmatprep.subr.mxu0 0.0
    %198 = vmatpush1.msra.mxu0 %v85
    %199 = vmatprep.subr.mxu0 0.0
    %200 = vmatpush2.msra.mxu0 0.0
    %201 = vmatprep.subr.mxu0 0.0
    %202 = vmatpush2.msra.mxu0 0.0
    %203 = vmatprep.subr.mxu0 0.0
    %204 = vmatpush2.msra.mxu0 0.0
    %205 = vmatprep.subr.mxu0 0.0
    %206 = vmatpush2.msra.mxu0 0.0
    %207 = vmatprep.subr.mxu0 0.0
    %208 = vmatpush2.msra.mxu0 0.0
    %209 = vmatprep.subr.mxu0 0.0
    %210 = vmatpush2.msra.mxu0 0.0
    %211 = vmatprep.subr.mxu0 0.0
    %212 = vmatpush2.msra.mxu0 0.0
    %213 = vmatprep.subr.mxu0 0.0
    %214 = vmatpush2.msra.mxu0 0.0
    %215 = vmatprep.subr.mxu0 0.0
    %216 = vmatpush2.msra.mxu0 0.0
    %217 = vmatprep.subr.mxu0 0.0
    %218 = vmatpush2.msra.mxu0 0.0
    %219 = vmatprep.subr.mxu0 0.0
    %220 = vmatpush2.msra.mxu0 0.0
    %221 = vmatprep.subr.mxu0 0.0
    %222 = vmatpush2.msra.mxu0 0.0
    %223 = vmatprep.subr.mxu0 0.0
    %224 = vmatpush2.msra.mxu0 0.0
    %225 = vmatprep.subr.mxu0 0.0
    %226 = vmatpush2.msra.mxu0 0.0
    %227 = vmatprep.subr.mxu0 0.0
    %228 = vmatpush2.msra.mxu0 0.0
    %229 = vmatprep.subr.mxu0 0.0
    %230 = vmatpush2.msra.mxu0 0.0
    %231 = vmatprep.mubr.f32.mxu0 0.0
    %232 = vmatmul.mubr.f32.gmra.mxu0 %v95
    %v233 = vpop.f32.mrf.mxu0
    %v234 = vadd.f32 %v91, %v233
    %v235 = vpop.f32.mrf.mxu0
    %236 = vdwg.mxu0
    %v237 = vmax.f32 %v164, 0.0
    %v238 = vmax.f32 %v234, 0.0
    %239 = vst.msk [vmem:[#allocation5] sm:$0xff] %vm57, %v237
    %240 = vst.msk [vmem:[#allocation5 + $0x8] sm:$0xff] %vm57, %v238
    // Predicated region
    $region22: #{tpu_custom_call.1} parent=1 // pred_check
      _
    $region23: #{tpu_custom_call.1} parent=1 // pred_check_branch
      %242 = sbr.rel (0) target = $region25
    $region24: #{tpu_custom_call.1} parent=1 // pred_region
      %s244 = ssub.s32 256, 256
      %245 = vsyncadd [#allocation4], %s244
      %s246 = sshll.u32 [#allocation5], 4
      %s247 = int_to_ptr.vmem [resolvable:$true] %s246
      %252 = dma.vmem_to_hbm [thread:$0]  %s247, 256, %s4, [#allocation4], 128, 128, 8
    $region25: #{tpu_custom_call.1} parent=1 // pred_fallthru
      _
    // Predicated region
    $region26: #{tpu_custom_call.1} parent=1 // pred_check
      _
    $region27: #{tpu_custom_call.1} parent=1 // pred_check_branch
      %254 = sbr.rel (0) target = $region29
    $region28: #{tpu_custom_call.1} parent=1 // pred_region
      %255 = dma.done [#allocation4], 256
    $region29: #{tpu_custom_call.1} parent=1 // pred_fallthru
      _
    %256 = vsyncpa [#allocation3], 1
    %257 = vsyncpa [#allocation4], 1

</llo_original>
